<compile_context>
chip_gen: v6e
topology: v6e:2x2x1
jax: 0.10.0
libtpu: 0.0.40
codegen_flags: <defaults>
</compile_context>

<pallas_src>
import functools

import jax
import jax.numpy as jnp
import numpy as np
from jax.experimental import pallas as pl
from jax.experimental.pallas import tpu as pltpu


def _conv_stats_kernel(p_ref, w_ref, b_ref, conv_ref, stats_ref):
    """ReLU -> fused (conv_1 | conv_2) matmul -> bias, plus per-tile BN partials."""
    # ReLU on the gathered patches (ReLU commutes with the stride-2 gather).
    p = jnp.maximum(p_ref[...], 0.0)                             # (TR, K)
    # Single fused matmul: block-diagonal weight implements conv_1, conv_2 and
    # the channel concat in one MXU pass.
    y = jnp.dot(p, w_ref[...], preferred_element_type=jnp.float32)
    y = y + b_ref[...]                                           # (TR, Cpad)
    conv_ref[...] = y
    # One-pass partial statistics for BatchNorm: sum and sum of squares.
    sums = jnp.sum(y, axis=0, keepdims=True)                     # (1, Cpad)
    sqs = jnp.sum(y * y, axis=0, keepdims=True)                  # (1, Cpad)
    pad = jnp.zeros((6, y.shape[1]), jnp.float32)                # sublane-pad to 8
    stats_ref[...] = jnp.concatenate([sums, sqs, pad], axis=0).reshape(1, 8, -1)


def _bn_apply_kernel(conv_ref, stats_ref, g_ref, beta_ref, o_ref, *, count, eps):
    """Combine per-tile partials, compute scale/shift, normalize one row tile."""
    tot = jnp.sum(stats_ref[...], axis=0)          # (8, Cpad): row0=sum, row1=sumsq
    inv_n = 1.0 / count
    mean = tot[0:1, :] * inv_n                     # (1, Cpad)
    ex2 = tot[1:2, :] * inv_n
    var = ex2 - mean * mean                        # biased batch variance
    scale = g_ref[...] * jax.lax.rsqrt(var + eps)  # rsqrt -> EUP slot
    shift = beta_ref[...] - mean * scale
    o_ref[...] = conv_ref[...] * scale + shift


def _pick_row_tile(rows):
    # Prefer >=2 tiles so the grid actually pipelines; fall back to one block.
    for t in (512, 256, 128, 64, 32, 16, 8):
        if rows % t == 0 and rows // t >= 2:
            return t
    for t in (512, 256, 128, 64, 32, 16, 8):
        if rows % t == 0:
            return t
    return rows


def factorized_reduce(x_nchw, w1, b1, w2, b2, gamma, beta, *, eps=1e-5):
    """ReLU -> cat([conv1(x), conv2(x[:, :, 1:, 1:])], C) -> BatchNorm2d. NCHW in/out.

    w1, w2: (C_out//2, C_in) weights of the two 1x1/stride-2 convs.
    """
    n, cin, h, w = x_nchw.shape
    assert h % 2 == 0 and w % 2 == 0, "FactorizedReduce expects even spatial dims"
    half = w1.shape[0]
    cout = 2 * half
    oh, ow = h // 2, w // 2
    rows = n * oh * ow
    k = 2 * cin
    cpad = ((cout + 127) // 128) * 128            # lane-dense output channels

    x32 = x_nchw.astype(jnp.float32)
    # Boundary glue: the im2col of a 1x1/stride-2 conv is just a stride-2 gather.
    x_nhwc = jnp.transpose(x32, (0, 2, 3, 1))
    p1 = x_nhwc[:, 0::2, 0::2, :]                 # samples feeding conv_1
    p2 = x_nhwc[:, 1::2, 1::2, :]                 # samples feeding conv_2 (1:,1: shift)
    patches = jnp.concatenate([p1, p2], axis=-1).reshape(rows, k)

    # Block-diagonal fused weight [[W1, 0], [0, W2]] -> one matmul == concat.
    z = jnp.zeros((cin, half), jnp.float32)
    w_cat = jnp.concatenate(
        [jnp.concatenate([w1.T.astype(jnp.float32), z], axis=1),
         jnp.concatenate([z, w2.T.astype(jnp.float32)], axis=1)],
        axis=0)                                                   # (K, Cout)
    w_pad = jnp.pad(w_cat, ((0, 0), (0, cpad - cout)))
    b_pad = jnp.pad(jnp.concatenate([b1, b2]).astype(jnp.float32),
                    (0, cpad - cout)).reshape(1, cpad)
    g_pad = jnp.pad(gamma.astype(jnp.float32), (0, cpad - cout)).reshape(1, cpad)
    beta_pad = jnp.pad(beta.astype(jnp.float32), (0, cpad - cout)).reshape(1, cpad)

    tr = _pick_row_tile(rows)
    num_tiles = rows // tr

    cparams = pltpu.CompilerParams(
        dimension_semantics=("parallel",),        # megacore-shard row tiles (v7x)
        vmem_limit_bytes=32 * 1024 * 1024,        # safe across v5e/v6e/v7x
    )

    conv_cost = pl.CostEstimate(
        flops=2 * rows * k * cpad + 3 * rows * cpad,
        transcendentals=0,
        bytes_accessed=4 * (rows * k + k * cpad + cpad
                            + rows * cpad + num_tiles * 8 * cpad))
    conv_out, stats = pl.pallas_call(
        _conv_stats_kernel,
        grid=(num_tiles,),
        in_specs=[pl.BlockSpec((tr, k), lambda i: (i, 0)),
                  pl.BlockSpec((k, cpad), lambda i: (0, 0)),
                  pl.BlockSpec((1, cpad), lambda i: (0, 0))],
        out_specs=(pl.BlockSpec((tr, cpad), lambda i: (i, 0)),
                   pl.BlockSpec((1, 8, cpad), lambda i: (i, 0, 0))),
        out_shape=(jax.ShapeDtypeStruct((rows, cpad), jnp.float32),
                   jax.ShapeDtypeStruct((num_tiles, 8, cpad), jnp.float32)),
        compiler_params=cparams,
        cost_estimate=conv_cost,
    )(patches, w_pad, b_pad)

    bn_cost = pl.CostEstimate(
        flops=2 * rows * cpad + 10 * num_tiles * cpad,
        transcendentals=num_tiles * cpad,
        bytes_accessed=4 * (2 * rows * cpad + num_tiles * 8 * cpad + 2 * cpad))
    y = pl.pallas_call(
        functools.partial(_bn_apply_kernel, count=float(rows), eps=eps),
        grid=(num_tiles,),
        in_specs=[pl.BlockSpec((tr, cpad), lambda i: (i, 0)),
                  pl.BlockSpec((num_tiles, 8, cpad), lambda i: (0, 0, 0)),
                  pl.BlockSpec((1, cpad), lambda i: (0, 0)),
                  pl.BlockSpec((1, cpad), lambda i: (0, 0))],
        out_specs=pl.BlockSpec((tr, cpad), lambda i: (i, 0)),
        out_shape=jax.ShapeDtypeStruct((rows, cpad), jnp.float32),
        compiler_params=cparams,
        cost_estimate=bn_cost,
    )(conv_out, stats, g_pad, beta_pad)

    # Strip channel padding and return to NCHW.
    return jnp.transpose(y[:, :cout].reshape(n, oh, ow, cout), (0, 3, 1, 2))


def _reference(x, w1, b1, w2, b2, gamma, beta, eps=1e-5):
    """Pure-JAX reference matching the PyTorch FactorizedReduce forward."""
    xr = jnp.maximum(x, 0.0)
    dn = ('NCHW', 'OIHW', 'NCHW')
    y1 = jax.lax.conv_general_dilated(
        xr, w1[:, :, None, None], (2, 2), 'VALID',
        dimension_numbers=dn) + b1[None, :, None, None]
    y2 = jax.lax.conv_general_dilated(
        xr[:, :, 1:, 1:], w2[:, :, None, None], (2, 2), 'VALID',
        dimension_numbers=dn) + b2[None, :, None, None]
    y = jnp.concatenate([y1, y2], axis=1)
    mean = jnp.mean(y, axis=(0, 2, 3), keepdims=True)
    var = jnp.mean((y - mean) ** 2, axis=(0, 2, 3), keepdims=True)
    yhat = (y - mean) * jax.lax.rsqrt(var + eps)
    return yhat * gamma[None, :, None, None] + beta[None, :, None, None]


if __name__ == "__main__":
    # FactorizedReduce(C_in=4, C_out=16) on x of shape (2, 4, 16, 16).
    N, C_in, H, W = 2, 4, 16, 16
    C_out = 16
    half = C_out // 2

    key = jax.random.PRNGKey(0)
    kx, k1, k2, kb1, kb2 = jax.random.split(key, 5)
    x = jax.random.normal(kx, (N, C_in, H, W), dtype=jnp.float32)

    # Deterministic synthetic params; shapes match nn.Conv2d(1x1) / BatchNorm2d.
    fan_in = C_in  # 1x1 conv
    w1 = jax.random.normal(k1, (half, C_in), dtype=jnp.float32) / np.sqrt(fan_in)
    w2 = jax.random.normal(k2, (half, C_in), dtype=jnp.float32) / np.sqrt(fan_in)
    b1 = jax.random.normal(kb1, (half,), dtype=jnp.float32) * 0.1
    b2 = jax.random.normal(kb2, (half,), dtype=jnp.float32) * 0.1
    gamma = jnp.ones((C_out,), dtype=jnp.float32)   # BatchNorm2d affine init
    beta = jnp.zeros((C_out,), dtype=jnp.float32)

    out = factorized_reduce(x, w1, b1, w2, b2, gamma, beta)
    out = jax.block_until_ready(out)

    ref = _reference(x, w1, b1, w2, b2, gamma, beta)
    np.testing.assert_allclose(np.asarray(out), np.asarray(ref),
                               rtol=1e-4, atol=1e-4)
    print("KERNEL_OK")
</pallas_src>

<mosaic_0001>
module attributes {stable_mosaic.version = 11 : i64} {
  func.func @_conv_stats_kernel(%arg0: i32, %arg1: memref<64x8xf32, #tpu.memory_space<vmem>>, %arg2: memref<8x128xf32, #tpu.memory_space<vmem>>, %arg3: memref<1x128xf32, #tpu.memory_space<vmem>>, %arg4: memref<64x128xf32, #tpu.memory_space<vmem>>, %arg5: memref<1x8x128xf32, #tpu.memory_space<vmem>>) attributes {dimension_semantics = [#tpu.dimension_semantics<parallel>], iteration_bounds = array<i64: 2>, scalar_prefetch = 0 : i64, scratch_operands = 0 : i64, tpu.core_type = #tpu.core_type<tc>, window_params = [{transform_indices = @transform_0, window_bounds = array<i64: 64, 8>}, {pipeline_mode = #tpu.pipeline_mode<synchronous>, transform_indices = @transform_1, window_bounds = array<i64: 8, 128>}, {pipeline_mode = #tpu.pipeline_mode<synchronous>, transform_indices = @transform_2, window_bounds = array<i64: 1, 128>}, {transform_indices = @transform_3, window_bounds = array<i64: 64, 128>}, {transform_indices = @transform_4, window_bounds = array<i64: 1, 8, 128>}]} {
    %c0 = arith.constant 0 : index
    %c0_0 = arith.constant 0 : index
    %0 = vector.load %arg1[%c0, %c0_0] : memref<64x8xf32, #tpu.memory_space<vmem>>, vector<64x8xf32>
    %cst = arith.constant 0.000000e+00 : f32
    %1 = vector.broadcast %cst : f32 to vector<64x8xf32>
    %2 = arith.maximumf %0, %1 : vector<64x8xf32>
    %c0_1 = arith.constant 0 : index
    %c0_2 = arith.constant 0 : index
    %3 = vector.load %arg2[%c0_1, %c0_2] : memref<8x128xf32, #tpu.memory_space<vmem>>, vector<8x128xf32>
    %cst_3 = arith.constant dense<0.000000e+00> : vector<64x128xf32>
    %4 = tpu.matmul %2, %3, %cst_3 {dimension_numbers = #tpu.dot_dimension_numbers<[1], [0], [0], [1], [0, 0, 1, 1], [], []>} : vector<64x8xf32>, vector<8x128xf32>, vector<64x128xf32> -> vector<64x128xf32>
    %c0_4 = arith.constant 0 : index
    %c0_5 = arith.constant 0 : index
    %5 = vector.load %arg3[%c0_4, %c0_5] : memref<1x128xf32, #tpu.memory_space<vmem>>, vector<1x128xf32>
    %6 = vector.broadcast %5 : vector<1x128xf32> to vector<64x128xf32>
    %7 = arith.addf %4, %6 : vector<64x128xf32>
    %c0_6 = arith.constant 0 : index
    %c0_7 = arith.constant 0 : index
    %8 = vector.load %arg4[%c0_6, %c0_7] : memref<64x128xf32, #tpu.memory_space<vmem>>, vector<64x128xf32>
    tpu.vector_store %arg4[%c0_6, %c0_7], %7 {strides = array<i32>} : memref<64x128xf32, #tpu.memory_space<vmem>>, vector<64x128xf32>,
    %cst_8 = arith.constant dense<0.000000e+00> : vector<128xf32>
    %9 = vector.multi_reduction <add>, %7, %cst_8 [0] : vector<64x128xf32> to vector<128xf32>
    %10 = vector.shape_cast %9 : vector<128xf32> to vector<1x128xf32>
    %11 = arith.mulf %7, %7 : vector<64x128xf32>
    %cst_9 = arith.constant dense<0.000000e+00> : vector<128xf32>
    %12 = vector.multi_reduction <add>, %11, %cst_9 [0] : vector<64x128xf32> to vector<128xf32>
    %13 = vector.shape_cast %12 : vector<128xf32> to vector<1x128xf32>
    %cst_10 = arith.constant 0.000000e+00 : f32
    %14 = vector.broadcast %cst_10 : f32 to vector<6x128xf32>
    %15 = tpu.concatenate %10, %13, %14 in 0 : vector<1x128xf32>, vector<1x128xf32>, vector<6x128xf32> -> vector<8x128xf32>
    %16 = vector.shape_cast %15 : vector<8x128xf32> to vector<1x8x128xf32>
    %c0_11 = arith.constant 0 : index
    %c0_12 = arith.constant 0 : index
    %c0_13 = arith.constant 0 : index
    %17 = vector.load %arg5[%c0_11, %c0_12, %c0_13] : memref<1x8x128xf32, #tpu.memory_space<vmem>>, vector<1x8x128xf32>
    tpu.vector_store %arg5[%c0_11, %c0_12, %c0_13], %16 {strides = array<i32>} : memref<1x8x128xf32, #tpu.memory_space<vmem>>, vector<1x8x128xf32>,
    return
  }
  func.func @transform_0(%arg0: i32) -> (i32, i32) {
    %c0_i32 = arith.constant 0 : i32
    %c0_i32_0 = arith.constant 0 : i32
    return %arg0, %c0_i32 : i32, i32
  }
  func.func @transform_1(%arg0: i32) -> (i32, i32) {
    %c0_i32 = arith.constant 0 : i32
    %c0_i32_0 = arith.constant 0 : i32
    %c0_i32_1 = arith.constant 0 : i32
    return %c0_i32, %c0_i32_0 : i32, i32
  }
  func.func @transform_2(%arg0: i32) -> (i32, i32) {
    %c0_i32 = arith.constant 0 : i32
    %c0_i32_0 = arith.constant 0 : i32
    %c0_i32_1 = arith.constant 0 : i32
    return %c0_i32, %c0_i32_0 : i32, i32
  }
  func.func @transform_3(%arg0: i32) -> (i32, i32) {
    %c0_i32 = arith.constant 0 : i32
    %c0_i32_0 = arith.constant 0 : i32
    return %arg0, %c0_i32 : i32, i32
  }
  func.func @transform_4(%arg0: i32) -> (i32, i32, i32) {
    %c0_i32 = arith.constant 0 : i32
    %c0_i32_0 = arith.constant 0 : i32
    %c0_i32_1 = arith.constant 0 : i32
    return %arg0, %c0_i32, %c0_i32_0 : i32, i32, i32
  }
}

</mosaic_0001>

<llo_original>
// kernel: tpu_custom_call.1
$region0: #{tpu_custom_call.1}
  #allocation0 [shape = 'u32[]', space=smem, size = 0x4, offset = 0x4, fixed_abs, tag = 'smem constant byte address 0x4 - core index']
  #allocation1 [shape = 'u32[144,128]{1,0:T(1,128)}', space=vmem, size = 0x12000, scoped, tag = 'internal scratch']
  %s0 = inlined_call_operand.vmem [shape: f32[128,8], index: 0, kind: input, shape index: {}]
  %s1 = inlined_call_operand.vmem [shape: f32[8,128], index: 1, kind: input, shape index: {}]
  %s2 = inlined_call_operand.vmem [shape: f32[1,128], index: 2, kind: input, shape index: {}]
  %s3 = inlined_call_operand.hbm [shape: f32[128,128], index: 3, kind: output, shape index: {0}]
  %s4 = inlined_call_operand.hbm [shape: f32[2,8,128], index: 4, kind: output, shape index: {1}]
  %5 = xla_tuple %s3, %s4
  %s6 = sld [smem:[#allocation0]]
  $region53: #{tpu_custom_call.1} parent=0
    _
  %s8 = ssub.s32 1, %s6
  %s9 = scalar_select 0, %s8, %s6
  $region1: #{tpu_custom_call.1} parent=0
    #allocation2 [shape = 'u8[65536]{0}', space=vmem, size = 0x10000, scoped, tag = 'output window, operand 0']
    #allocation3 [shape = 's32[2]{0}', space=sflag, size = 0x8, scoped, tag = 'scoped memory for tpu_custom_call.1']
    #allocation4 [shape = 'u8[8192]{0}', space=vmem, size = 0x2000, scoped, tag = 'output window, operand 1']
    #allocation5 [shape = 's32[2]{0}', space=sflag, size = 0x8, scoped, tag = 'scoped memory for tpu_custom_call.1']
    %10 = vsyncpa [#allocation3], 0
    %s11 = scalar_lea.sflag [#allocation3], 1
    %12 = vsyncpa %s11, 0
    %13 = vsyncpa [#allocation5], 0
    %s14 = scalar_lea.sflag [#allocation5], 1
    %15 = vsyncpa %s14, 0
    loop: start=0, step=1, limit=4
    $region2: #{tpu_custom_call.1} parent=1 // loop_pre_header
      _
    $region3: #{tpu_custom_call.1} parent=1 // loop_header
      %s17 = sphi 0, %s21
      %p18 = scmp.ge.s32.totalorder %s17, 4
      %s27 = sphi 0, %s29
      %s30 = sphi 0, %s27
      %s31 = sphi 0, %s30
      %s47 = sphi 0, %s31
      %s51 = sphi 0, %s51
      %s53 = sphi 0, %s51
      %s54 = sphi 0, %s53
      %s68 = sphi 0, %s54
      %s72 = sphi 0, %s72
      %s74 = sphi 0, %s72
      %s75 = sphi 0, %s74
      %s89 = sphi 0, %s75
      %s95 = sphi 0, %s97
      %s98 = sphi 0, %s95
      %s99 = sphi 0, %s98
      %s115 = sphi 0, %s99
      %s121 = sphi 0, %s123
      %s124 = sphi 0, %s121
      %s125 = sphi 0, %s124
      %s141 = sphi 0, %s125
    $region4: #{tpu_custom_call.1} parent=1 // loop_header_branch
      %20 = sbr.rel (%p18) target = $region8
    $region5: #{tpu_custom_call.1} parent=1 // loop_body
      %s22 = ssub.s32 %s17, 1
      %s23 = ssub.s32 %s17, 2
      %s24 = sadd.s32 %s17, 1
      %s25 = ssub.s32 %s17, %s24
      %p26 = scmp.eq.s32.totalorder %s25, 0
      %s28 = sadd.s32 %s27, 1
      %s29 = scalar_select %p26, %s27, %s28
      %p32 = pneg %p26
      %p33 = scmp.eq.s32.totalorder %s17, 1
      %p34 = por %p32, %p33
      %p35 = scmp.ne.s32.totalorder %s27, %s30
      %p36 = scmp.eq.s32.totalorder %s17, 0
      %p37 = por %p35, %p36
      %p38 = scmp.ne.s32.totalorder %s27, %s30
      %p39 = scmp.eq.s32.totalorder %s22, 1
      %p40 = por %p38, %p39
      %p41 = scmp.ne.s32.totalorder %s30, %s31
      %p42 = scmp.eq.s32.totalorder %s22, 0
      %p43 = por %p41, %p42
      %p44 = scmp.ne.s32.totalorder %s30, %s31
      %p45 = scmp.eq.s32.totalorder %s23, 1
      %p46 = por %p44, %p45
      %p48 = scmp.ne.s32.totalorder %s31, %s47
      %p49 = scmp.eq.s32.totalorder %s23, 0
      %p50 = por %p48, %p49
      %s52 = sadd.s32 %s51, 1
      %p55 = scmp.eq.s32.totalorder %s17, 1
      %p56 = scmp.ne.s32.totalorder %s51, %s53
      %p57 = scmp.eq.s32.totalorder %s17, 0
      %p58 = por %p56, %p57
      %p59 = scmp.ne.s32.totalorder %s51, %s53
      %p60 = scmp.eq.s32.totalorder %s22, 1
      %p61 = por %p59, %p60
      %p62 = scmp.ne.s32.totalorder %s53, %s54
      %p63 = scmp.eq.s32.totalorder %s22, 0
      %p64 = por %p62, %p63
      %p65 = scmp.ne.s32.totalorder %s53, %s54
      %p66 = scmp.eq.s32.totalorder %s23, 1
      %p67 = por %p65, %p66
      %p69 = scmp.ne.s32.totalorder %s54, %s68
      %p70 = scmp.eq.s32.totalorder %s23, 0
      %p71 = por %p69, %p70
      %s73 = sadd.s32 %s72, 1
      %p76 = scmp.eq.s32.totalorder %s17, 1
      %p77 = scmp.ne.s32.totalorder %s72, %s74
      %p78 = scmp.eq.s32.totalorder %s17, 0
      %p79 = por %p77, %p78
      %p80 = scmp.ne.s32.totalorder %s72, %s74
      %p81 = scmp.eq.s32.totalorder %s22, 1
      %p82 = por %p80, %p81
      %p83 = scmp.ne.s32.totalorder %s74, %s75
      %p84 = scmp.eq.s32.totalorder %s22, 0
      %p85 = por %p83, %p84
      %p86 = scmp.ne.s32.totalorder %s74, %s75
      %p87 = scmp.eq.s32.totalorder %s23, 1
      %p88 = por %p86, %p87
      %p90 = scmp.ne.s32.totalorder %s75, %s89
      %p91 = scmp.eq.s32.totalorder %s23, 0
      %p92 = por %p90, %p91
      %s93 = ssub.s32 %s17, %s24
      %p94 = scmp.eq.s32.totalorder %s93, 0
      %s96 = sadd.s32 %s95, 1
      %s97 = scalar_select %p94, %s95, %s96
      %p100 = pneg %p94
      %p101 = scmp.eq.s32.totalorder %s17, 1
      %p102 = por %p100, %p101
      %p103 = scmp.ne.s32.totalorder %s95, %s98
      %p104 = scmp.eq.s32.totalorder %s17, 0
      %p105 = por %p103, %p104
      %p106 = scmp.ne.s32.totalorder %s95, %s98
      %p107 = scmp.eq.s32.totalorder %s22, 1
      %p108 = por %p106, %p107
      %p109 = scmp.ne.s32.totalorder %s98, %s99
      %p110 = scmp.eq.s32.totalorder %s22, 0
      %p111 = por %p109, %p110
      %p112 = scmp.ne.s32.totalorder %s98, %s99
      %p113 = scmp.eq.s32.totalorder %s23, 1
      %p114 = por %p112, %p113
      %p116 = scmp.ne.s32.totalorder %s99, %s115
      %p117 = scmp.eq.s32.totalorder %s23, 0
      %p118 = por %p116, %p117
      %s119 = ssub.s32 %s17, %s24
      %p120 = scmp.eq.s32.totalorder %s119, 0
      %s122 = sadd.s32 %s121, 1
      %s123 = scalar_select %p120, %s121, %s122
      %p126 = pneg %p120
      %p127 = scmp.eq.s32.totalorder %s17, 1
      %p128 = por %p126, %p127
      %p129 = scmp.ne.s32.totalorder %s121, %s124
      %p130 = scmp.eq.s32.totalorder %s17, 0
      %p131 = por %p129, %p130
      %p132 = scmp.ne.s32.totalorder %s121, %s124
      %p133 = scmp.eq.s32.totalorder %s22, 1
      %p134 = por %p132, %p133
      %p135 = scmp.ne.s32.totalorder %s124, %s125
      %p136 = scmp.eq.s32.totalorder %s22, 0
      %p137 = por %p135, %p136
      %p138 = scmp.ne.s32.totalorder %s124, %s125
      %p139 = scmp.eq.s32.totalorder %s23, 1
      %p140 = por %p138, %p139
      %p142 = scmp.ne.s32.totalorder %s125, %s141
      %p143 = scmp.eq.s32.totalorder %s23, 0
      %p144 = por %p142, %p143
      %p145 = scmp.le.s32.totalorder 1, %s17
      %p146 = scmp.lt.s32.totalorder %s17, 3
      %p147 = pnand %p145, %p146
      %p148 = pneg %p147
      // Predicated region
      $region9: #{tpu_custom_call.1} parent=5 // pred_check
        _
      $region10: #{tpu_custom_call.1} parent=5 // pred_check_branch
        %150 = sbr.rel (%p147) target = $region12
      $region11: #{tpu_custom_call.1} parent=5 // pred_region
        %s151 = ssub.s32 %s17, 1
        // Predicated region
        $region13: #{tpu_custom_call.1} parent=11 // pred_check
          %p152 = pneg %p64
        $region14: #{tpu_custom_call.1} parent=11 // pred_check_branch
          %154 = sbr.rel (%p152) target = $region16
        $region15: #{tpu_custom_call.1} parent=11 // pred_region
          _
        $region16: #{tpu_custom_call.1} parent=11 // pred_fallthru
          _
        // Predicated region
        $region17: #{tpu_custom_call.1} parent=11 // pred_check
          %p155 = pneg %p85
        $region18: #{tpu_custom_call.1} parent=11 // pred_check_branch
          %157 = sbr.rel (%p155) target = $region20
        $region19: #{tpu_custom_call.1} parent=11 // pred_region
          _
        $region20: #{tpu_custom_call.1} parent=11 // pred_fallthru
          _
      $region12: #{tpu_custom_call.1} parent=5 // pred_fallthru
        _
      %p158 = scmp.lt.s32.totalorder %s17, 2
      // Predicated region
      $region21: #{tpu_custom_call.1} parent=5 // pred_check
        %p159 = pneg %p158
      $region22: #{tpu_custom_call.1} parent=5 // pred_check_branch
        %161 = sbr.rel (%p159) target = $region24
      $region23: #{tpu_custom_call.1} parent=5 // pred_region
        // Predicated region
        $region25: #{tpu_custom_call.1} parent=23 // pred_check
          %p162 = pneg %p37
        $region26: #{tpu_custom_call.1} parent=23 // pred_check_branch
          %164 = sbr.rel (%p162) target = $region28
        $region27: #{tpu_custom_call.1} parent=23 // pred_region
          %s165 = smul.u32 8, %s17
          %p166 = scmp.lt.s32.totalorder %s165, 15
          %s167 = scalar_select %p166, %s165, 15
          %s168 = smul.addr %s167, 8
          %s169 = scalar_lea.vmem %s0, %s168
          %s170 = smul.u32 8, %s17
        $region28: #{tpu_custom_call.1} parent=23 // pred_fallthru
          _
      $region24: #{tpu_custom_call.1} parent=5 // pred_fallthru
        _
      %p171 = scmp.le.s32.totalorder 1, %s17
      %p172 = scmp.lt.s32.totalorder %s17, 3
      %p173 = pnand %p171, %p172
      %p174 = pneg %p173
      // Predicated region
      $region29: #{tpu_custom_call.1} parent=5 // pred_check
        _
      $region30: #{tpu_custom_call.1} parent=5 // pred_check_branch
        %176 = sbr.rel (%p173) target = $region32
      $region31: #{tpu_custom_call.1} parent=5 // pred_region
        %s177 = ssub.s32 %s17, 1
        %s178 = smul.u32 8, %s22
        %p179 = scmp.lt.s32.totalorder %s178, 15
        %s180 = scalar_select %p179, %s178, 15
        %s181 = smul.addr %s180, 8
        %s182 = scalar_lea.vmem %s0, %s181
        %p183 = pneg %p43
        %p184 = pneg %p40
        %p185 = pneg %p64
        %p186 = pneg %p61
        %p187 = pneg %p85
        %p188 = pneg %p82
        %p189 = pneg %p111
        %p190 = pneg %p108
        %s191 = sand.u32 %s98, 1
        %s192 = scalar_lea.sflag [#allocation3], %s191
        %s193 = sand.u32 %s98, 1
        %s194 = smul.addr %s193, 64
        %s195 = scalar_lea.vmem [#allocation2], %s194
        %p196 = pneg %p137
        %p197 = pneg %p134
        %s198 = sand.u32 %s124, 1
        %s199 = scalar_lea.sflag [#allocation5], %s198
        %s200 = sand.u32 %s124, 1
        %s201 = smul.addr %s200, 8
        %s202 = scalar_lea.vmem [#allocation4], %s201
        %s203 = smul.u32 8, %s22
        %p204 = scmp.lt.s32.totalorder %s203, 15
        %s205 = scalar_select %p204, %s203, 15
        %s206 = smul.addr %s205, 8
        %s207 = scalar_lea.vmem %s0, %s206
        %s208 = smul.u32 8, %s22
        %s209 = smul.u32 8, %s22
        %v210 = vld [vmem:[%s207] sm:$0xff]
        %v211 = vld [vmem:[%s207 + $0x8] sm:$0xff]
        %v212 = vld [vmem:[%s207 + $0x10] sm:$0xff]
        %v213 = vld [vmem:[%s207 + $0x18] sm:$0xff]
        %v214 = vld [vmem:[%s207 + $0x20] sm:$0xff]
        %v215 = vld [vmem:[%s207 + $0x28] sm:$0xff]
        %v216 = vld [vmem:[%s207 + $0x30] sm:$0xff]
        %v217 = vld [vmem:[%s207 + $0x38] sm:$0xff]
        %v218 = vmax.f32 %v210, 0.0
        %v219 = vmax.f32 %v211, 0.0
        %v220 = vmax.f32 %v212, 0.0
        %v221 = vmax.f32 %v213, 0.0
        %v222 = vmax.f32 %v214, 0.0
        %v223 = vmax.f32 %v215, 0.0
        %v224 = vmax.f32 %v216, 0.0
        %v225 = vmax.f32 %v217, 0.0
        %v226 = vld [vmem:[%s1] sm:$0xff]
        %v227 = vld [vmem:[%s2] sm:$0x1]
        %v229 = vlaneseq
        %v230 = vshrl.u32 %v229, 7
        %v231 = vsub.s32 0, %v230
        %v232 = vrot.slane %v227, %v231
        %vm234 = vcmask 64512
        %v236 = vsel %vm234, %v218, 0
        %v239 = vsel %vm234, %v219, 0
        %v242 = vsel %vm234, %v220, 0
        %v245 = vsel %vm234, %v221, 0
        %v248 = vsel %vm234, %v222, 0
        %v251 = vsel %vm234, %v223, 0
        %v254 = vsel %vm234, %v224, 0
        %v257 = vsel %vm234, %v225, 0
        %259 = vmatprep.subr.mxu0 0.0
        %260 = vmatpush1.msra.mxu0 0.0
        %261 = vmatprep.subr.mxu0 0.0
        %262 = vmatpush1.msra.mxu0 0.0
        %263 = vmatprep.subr.mxu0 0.0
        %264 = vmatpush1.msra.mxu0 0.0
        %265 = vmatprep.subr.mxu0 0.0
        %266 = vmatpush1.msra.mxu0 0.0
        %267 = vmatprep.subr.mxu0 0.0
        %268 = vmatpush1.msra.mxu0 0.0
        %269 = vmatprep.subr.mxu0 0.0
        %270 = vmatpush1.msra.mxu0 0.0
        %271 = vmatprep.subr.mxu0 0.0
        %272 = vmatpush1.msra.mxu0 0.0
        %273 = vmatprep.subr.mxu0 0.0
        %274 = vmatpush1.msra.mxu0 0.0
        %275 = vmatprep.subr.mxu0 0.0
        %276 = vmatpush1.msra.mxu0 0.0
        %277 = vmatprep.subr.mxu0 0.0
        %278 = vmatpush1.msra.mxu0 0.0
        %279 = vmatprep.subr.mxu0 0.0
        %280 = vmatpush1.msra.mxu0 0.0
        %281 = vmatprep.subr.mxu0 0.0
        %282 = vmatpush1.msra.mxu0 0.0
        %283 = vmatprep.subr.mxu0 0.0
        %284 = vmatpush1.msra.mxu0 0.0
        %285 = vmatprep.subr.mxu0 0.0
        %286 = vmatpush1.msra.mxu0 0.0
        %287 = vmatprep.subr.mxu0 0.0
        %288 = vmatpush1.msra.mxu0 0.0
        %289 = vmatprep.subr.mxu0 0.0
        %290 = vmatpush1.msra.mxu0 %v226
        %291 = vmatprep.subr.mxu0 0.0
        %292 = vmatpush2.msra.mxu0 0.0
        %293 = vmatprep.subr.mxu0 0.0
        %294 = vmatpush2.msra.mxu0 0.0
        %295 = vmatprep.subr.mxu0 0.0
        %296 = vmatpush2.msra.mxu0 0.0
        %297 = vmatprep.subr.mxu0 0.0
        %298 = vmatpush2.msra.mxu0 0.0
        %299 = vmatprep.subr.mxu0 0.0
        %300 = vmatpush2.msra.mxu0 0.0
        %301 = vmatprep.subr.mxu0 0.0
        %302 = vmatpush2.msra.mxu0 0.0
        %303 = vmatprep.subr.mxu0 0.0
        %304 = vmatpush2.msra.mxu0 0.0
        %305 = vmatprep.subr.mxu0 0.0
        %306 = vmatpush2.msra.mxu0 0.0
        %307 = vmatprep.subr.mxu0 0.0
        %308 = vmatpush2.msra.mxu0 0.0
        %309 = vmatprep.subr.mxu0 0.0
        %310 = vmatpush2.msra.mxu0 0.0
        %311 = vmatprep.subr.mxu0 0.0
        %312 = vmatpush2.msra.mxu0 0.0
        %313 = vmatprep.subr.mxu0 0.0
        %314 = vmatpush2.msra.mxu0 0.0
        %315 = vmatprep.subr.mxu0 0.0
        %316 = vmatpush2.msra.mxu0 0.0
        %317 = vmatprep.subr.mxu0 0.0
        %318 = vmatpush2.msra.mxu0 0.0
        %319 = vmatprep.subr.mxu0 0.0
        %320 = vmatpush2.msra.mxu0 0.0
        %321 = vmatprep.subr.mxu0 0.0
        %322 = vmatpush2.msra.mxu0 0.0
        %323 = vmatprep.mubr.f32.mxu0 0.0
        %324 = vmatmul.mubr.f32.gmra.mxu0 %v236
        %v325 = vpop.f32.mrf.mxu0
        %v326 = vadd.f32 %v232, %v325
        %v327 = vpop.f32.mrf.mxu0
        %328 = vmatprep.mubr.f32.mxu0 0.0
        %329 = vmatmul.mubr.f32.gmra.mxu0 %v239
        %v330 = vpop.f32.mrf.mxu0
        %v331 = vadd.f32 %v232, %v330
        %v332 = vpop.f32.mrf.mxu0
        %333 = vmatprep.mubr.f32.mxu0 0.0
        %334 = vmatmul.mubr.f32.gmra.mxu0 %v242
        %v335 = vpop.f32.mrf.mxu0
        %v336 = vadd.f32 %v232, %v335
        %v337 = vpop.f32.mrf.mxu0
        %338 = vmatprep.mubr.f32.mxu0 0.0
        %339 = vmatmul.mubr.f32.gmra.mxu0 %v245
        %v340 = vpop.f32.mrf.mxu0
        %v341 = vadd.f32 %v232, %v340
        %v342 = vpop.f32.mrf.mxu0
        %343 = vmatprep.mubr.f32.mxu0 0.0
        %344 = vmatmul.mubr.f32.gmra.mxu0 %v248
        %v345 = vpop.f32.mrf.mxu0
        %v346 = vadd.f32 %v232, %v345
        %v347 = vpop.f32.mrf.mxu0
        %348 = vmatprep.mubr.f32.mxu0 0.0
        %349 = vmatmul.mubr.f32.gmra.mxu0 %v251
        %v350 = vpop.f32.mrf.mxu0
        %v351 = vadd.f32 %v232, %v350
        %v352 = vpop.f32.mrf.mxu0
        %353 = vmatprep.mubr.f32.mxu0 0.0
        %354 = vmatmul.mubr.f32.gmra.mxu0 %v254
        %v355 = vpop.f32.mrf.mxu0
        %v356 = vadd.f32 %v232, %v355
        %v357 = vpop.f32.mrf.mxu0
        %358 = vmatprep.mubr.f32.mxu0 0.0
        %359 = vmatmul.mubr.f32.gmra.mxu0 %v257
        %v360 = vpop.f32.mrf.mxu0
        %v361 = vadd.f32 %v232, %v360
        %v362 = vpop.f32.mrf.mxu0
        %363 = vdwg.mxu0
        %364 = vst [vmem:[%s195] sm:$0xff] %v326
        %365 = vst [vmem:[%s195 + $0x8] sm:$0xff] %v331
        %366 = vst [vmem:[%s195 + $0x10] sm:$0xff] %v336
        %367 = vst [vmem:[%s195 + $0x18] sm:$0xff] %v341
        %368 = vst [vmem:[%s195 + $0x20] sm:$0xff] %v346
        %369 = vst [vmem:[%s195 + $0x28] sm:$0xff] %v351
        %370 = vst [vmem:[%s195 + $0x30] sm:$0xff] %v356
        %371 = vst [vmem:[%s195 + $0x38] sm:$0xff] %v361
        %v372 = vadd.f32 %v326, %v331
        %v373 = vadd.f32 %v372, %v336
        %v374 = vadd.f32 %v373, %v341
        %v375 = vadd.f32 %v374, %v346
        %v376 = vadd.f32 %v375, %v351
        %v377 = vadd.f32 %v376, %v356
        %v378 = vadd.f32 %v377, %v361
        %v379 = vrot.slane %v378, 4
        %v380 = vadd.f32 %v378, %v379
        %v381 = vrot.slane %v380, 2
        %v382 = vadd.f32 %v380, %v381
        %v383 = vrot.slane %v382, 1
        %v384 = vadd.f32 %v382, %v383
        %v385 = vmul.f32 %v326, %v326
        %v386 = vmul.f32 %v331, %v331
        %v387 = vmul.f32 %v336, %v336
        %v388 = vmul.f32 %v341, %v341
        %v389 = vmul.f32 %v346, %v346
        %v390 = vmul.f32 %v351, %v351
        %v391 = vmul.f32 %v356, %v356
        %v392 = vmul.f32 %v361, %v361
        %v393 = vadd.f32 %v385, %v386
        %v394 = vadd.f32 %v393, %v387
        %v395 = vadd.f32 %v394, %v388
        %v396 = vadd.f32 %v395, %v389
        %v397 = vadd.f32 %v396, %v390
        %v398 = vadd.f32 %v397, %v391
        %v399 = vadd.f32 %v398, %v392
        %v400 = vrot.slane %v399, 4
        %v401 = vadd.f32 %v399, %v400
        %v402 = vrot.slane %v401, 2
        %v403 = vadd.f32 %v401, %v402
        %v404 = vrot.slane %v403, 1
        %v405 = vadd.f32 %v403, %v404
        %vm406 = vcmask 1040384
        %v407 = vsel %vm406, %v384, %v405
        %vm408 = vcmask 1041408
        %v409 = vsel %vm408, %v407, 0.0
        %410 = vst [vmem:[%s202] sm:$0xff] %v409
        %s411 = sand.u32 %s98, 1
        %s412 = scalar_lea.sflag [#allocation3], %s411
        %s413 = sand.u32 %s98, 1
        %s414 = smul.addr %s413, 64
        %s415 = scalar_lea.vmem [#allocation2], %s414
        %s416 = sand.u32 %s124, 1
        %s417 = scalar_lea.sflag [#allocation5], %s416
        %s418 = sand.u32 %s124, 1
        %s419 = smul.addr %s418, 8
        %s420 = scalar_lea.vmem [#allocation4], %s419
        // Predicated region
        $region33: #{tpu_custom_call.1} parent=31 // pred_check
          %p421 = pneg %p108
        $region34: #{tpu_custom_call.1} parent=31 // pred_check_branch
          %423 = sbr.rel (%p421) target = $region36
        $region35: #{tpu_custom_call.1} parent=31 // pred_region
          %s424 = smul.u32 8, %s22
          %s426 = ssub.s32 1024, 1024
          %427 = vsyncadd %s412, %s426
          %s428 = smul.addr %s424, 128
          %s429 = scalar_lea.hbm %s3, %s428
          %s430 = sshll.u32 %s415, 4
          %s431 = int_to_ptr.vmem [resolvable:$true] %s430
          %436 = dma.vmem_to_hbm [thread:$0]  %s431, 1024, %s429, %s412, 128, 128, 8
        $region36: #{tpu_custom_call.1} parent=31 // pred_fallthru
          _
        // Predicated region
        $region37: #{tpu_custom_call.1} parent=31 // pred_check
          %p437 = pneg %p134
        $region38: #{tpu_custom_call.1} parent=31 // pred_check_branch
          %439 = sbr.rel (%p437) target = $region40
        $region39: #{tpu_custom_call.1} parent=31 // pred_region
          %s441 = ssub.s32 128, 128
          %442 = vsyncadd %s417, %s441
          %s443 = smul.addr %s22, 128
          %s444 = scalar_lea.hbm %s4, %s443
          %s446 = sshll.u32 %s420, 4
          %s447 = int_to_ptr.vmem [resolvable:$true] %s446
          %449 = dma.vmem_to_hbm [thread:$0]  %s447, 128, %s444, %s417
        $region40: #{tpu_custom_call.1} parent=31 // pred_fallthru
          _
      $region32: #{tpu_custom_call.1} parent=5 // pred_fallthru
        _
      %p450 = scmp.le.s32.totalorder 2, %s17
      // Predicated region
      $region41: #{tpu_custom_call.1} parent=5 // pred_check
        %p451 = pneg %p450
      $region42: #{tpu_custom_call.1} parent=5 // pred_check_branch
        %453 = sbr.rel (%p451) target = $region44
      $region43: #{tpu_custom_call.1} parent=5 // pred_region
        %s454 = ssub.s32 %s17, 2
        // Predicated region
        $region45: #{tpu_custom_call.1} parent=43 // pred_check
          %p455 = pneg %p114
        $region46: #{tpu_custom_call.1} parent=43 // pred_check_branch
          %457 = sbr.rel (%p455) target = $region48
        $region47: #{tpu_custom_call.1} parent=43 // pred_region
          %s458 = sand.u32 %s99, 1
          %s459 = scalar_lea.sflag [#allocation3], %s458
          %s460 = sand.u32 %s99, 1
          %s461 = smul.addr %s460, 64
          %s462 = scalar_lea.vmem [#allocation2], %s461
          %463 = dma.done %s459, 1024
        $region48: #{tpu_custom_call.1} parent=43 // pred_fallthru
          _
        // Predicated region
        $region49: #{tpu_custom_call.1} parent=43 // pred_check
          %p464 = pneg %p140
        $region50: #{tpu_custom_call.1} parent=43 // pred_check_branch
          %466 = sbr.rel (%p464) target = $region52
        $region51: #{tpu_custom_call.1} parent=43 // pred_region
          %s467 = sand.u32 %s125, 1
          %s468 = scalar_lea.sflag [#allocation5], %s467
          %s469 = sand.u32 %s125, 1
          %s470 = smul.addr %s469, 8
          %s471 = scalar_lea.vmem [#allocation4], %s470
          %472 = dma.done %s468, 128
        $region52: #{tpu_custom_call.1} parent=43 // pred_fallthru
          _
      $region44: #{tpu_custom_call.1} parent=5 // pred_fallthru
        _
    $region6: #{tpu_custom_call.1} parent=1 // loop_footer
      %s21 = sadd.s32 1, %s17
    $region7: #{tpu_custom_call.1} parent=1 // loop_footer_branch
      %16 = sbr.rel target = $region3
    $region8: #{tpu_custom_call.1} parent=1 // loop_exit
      _
    %473 = vsyncpa [#allocation3], 1
    %s474 = scalar_lea.sflag [#allocation3], 1
    %475 = vsyncpa %s474, 1
    %476 = vsyncpa [#allocation5], 1
    %s477 = scalar_lea.sflag [#allocation5], 1
    %478 = vsyncpa %s477, 1

</llo_original>
